<compile_context>
chip_gen: v6e
topology: v6e:2x2x1
jax: 0.10.0
libtpu: 0.0.40
codegen_flags: <defaults>
</compile_context>

<pallas_src>
import functools

import jax
import jax.numpy as jnp
from jax.experimental import pallas as pl
from jax.experimental.pallas import tpu as pltpu


def _round_up(x, m):
    return (x + m - 1) // m * m


def _link_pred_kernel(z_ref, w_ref, b_ref, wf_ref, bfin_ref, o_ref):
    # z_ref : (tile_n, F)   bf16/f32  streamed activation tile (z_src||z_dst)
    # w_ref : (F, Cp)       bf16/f32  fused [W_src; W_dst] weight (resident)
    # b_ref : (1, Cp)       f32       fused bias b_src + b_dst (resident)
    # wf_ref: (1, Cp)       bf16/f32  final projection row (resident)
    # bfin  : (1,)          f32       final bias scalar (SMEM)
    # o_ref : (1, tile_n)   f32       lane-dense output slab
    h = jnp.dot(z_ref[...], w_ref[...], preferred_element_type=jnp.float32)
    h = jnp.maximum(h + b_ref[...], 0.0)                       # bias + ReLU in f32
    # Final projection as wf . h^T -> (1, tile_n): lane-dense store, no (C,1)
    # padded weight column, MXU handles the transposed contraction natively.
    out_row = jnp.einsum(
        "oc,nc->on", wf_ref[...], h.astype(wf_ref.dtype),
        preferred_element_type=jnp.float32)
    o_ref[...] = (out_row + bfin_ref[0]).astype(o_ref.dtype)


def link_predictor(z_src, z_dst, params, *, tile_n=512,
                   compute_dtype=jnp.bfloat16):
    """params: w_src/w_dst [C, C], w_fin [C, 1] (already [in, out] layout),
    b_src/b_dst [C], b_fin [1].  Returns [N, 1] in z_src.dtype."""
    N, C = z_src.shape
    out_dtype = z_src.dtype

    Cp = _round_up(C, 128)              # padded hidden width (lane-dense)
    F = _round_up(2 * C, 128)           # padded fused input width
    tile_n = _round_up(max(tile_n, 128), 128)
    tile_n = min(tile_n, _round_up(N, 128))   # don't over-pad tiny batches
    N_pad = _round_up(N, tile_n)

    # ---- one-time wrapper-side packing / padding (all zeros elsewhere) ----
    z_cat = jnp.zeros((N_pad, F), compute_dtype)
    z_cat = z_cat.at[:N, :C].set(z_src.astype(compute_dtype))
    z_cat = z_cat.at[:N, C:2 * C].set(z_dst.astype(compute_dtype))

    w_cat = jnp.zeros((F, Cp), compute_dtype)
    w_cat = w_cat.at[:C, :C].set(params["w_src"].astype(compute_dtype))
    w_cat = w_cat.at[C:2 * C, :C].set(params["w_dst"].astype(compute_dtype))

    b_cat = jnp.zeros((1, Cp), jnp.float32)
    b_cat = b_cat.at[0, :C].set(
        (params["b_src"] + params["b_dst"]).astype(jnp.float32))

    w_fin = jnp.zeros((1, Cp), compute_dtype)
    w_fin = w_fin.at[0, :C].set(params["w_fin"].reshape(-1).astype(compute_dtype))

    b_fin = params["b_fin"].reshape(1).astype(jnp.float32)

    grid = (N_pad // tile_n,)
    rows = lambda i: (i, 0)
    const = lambda i: (0, 0)

    raw = pl.pallas_call(
        _link_pred_kernel,
        out_shape=jax.ShapeDtypeStruct((1, N_pad), jnp.float32),
        grid_spec=pltpu.PrefetchScalarGridSpec(
            num_scalar_prefetch=0,
            grid=grid,
            in_specs=[
                pl.BlockSpec((tile_n, F), rows),    # z_cat tile (streamed)
                pl.BlockSpec((F, Cp), const),       # fused weight (resident)
                pl.BlockSpec((1, Cp), const),       # fused bias (resident)
                pl.BlockSpec((1, Cp), const),       # final-proj row (resident)
                pl.BlockSpec(memory_space=pltpu.MemorySpace.SMEM),  # b_fin
            ],
            out_specs=pl.BlockSpec((1, tile_n), lambda i: (0, i)),
        ),
        compiler_params=pltpu.CompilerParams(
            dimension_semantics=("parallel",),
            vmem_limit_bytes=32 * 1024 * 1024,
        ),
    )(z_cat, w_cat, b_cat, w_fin, b_fin)

    return raw.reshape(N_pad, 1)[:N].astype(out_dtype)


def init_params(key, in_channels, dtype=jnp.float32):
    """PyTorch-Linear-style init: U(-1/sqrt(fan_in), 1/sqrt(fan_in))."""
    ks = jax.random.split(key, 6)
    bound = 1.0 / jnp.sqrt(in_channels)
    u = lambda k, shape: jax.random.uniform(k, shape, dtype, -bound, bound)
    return {
        "w_src": u(ks[0], (in_channels, in_channels)),
        "b_src": u(ks[1], (in_channels,)),
        "w_dst": u(ks[2], (in_channels, in_channels)),
        "b_dst": u(ks[3], (in_channels,)),
        "w_fin": u(ks[4], (in_channels, 1)),
        "b_fin": u(ks[5], (1,)),
    }


def _reference(z_src, z_dst, params):
    h = (z_src @ params["w_src"] + params["b_src"]
         + z_dst @ params["w_dst"] + params["b_dst"])
    h = jnp.maximum(h, 0.0)
    return h @ params["w_fin"] + params["b_fin"]


if __name__ == "__main__":
    key = jax.random.PRNGKey(0)
    k_p, k_src, k_dst = jax.random.split(key, 3)

    N, C = 8, 32  # 8 node pairs, 32-dim embeddings
    params = init_params(k_p, C)
    z_src = jax.random.normal(k_src, (N, C), jnp.float32)
    z_dst = jax.random.normal(k_dst, (N, C), jnp.float32)

    ref = _reference(z_src, z_dst, params)

    # f32 path: must match the reference tightly.
    out_f32 = link_predictor(z_src, z_dst, params, compute_dtype=jnp.float32)
    jax.block_until_ready(out_f32)
    assert out_f32.shape == (N, 1)
    assert jnp.allclose(out_f32, ref, atol=1e-5, rtol=1e-5)

    # bf16 path (default, memory-bound production setting): loose tolerance.
    out_bf16 = link_predictor(z_src, z_dst, params)
    jax.block_until_ready(out_bf16)
    assert out_bf16.shape == (N, 1)
    assert jnp.allclose(out_bf16, ref, atol=5e-2, rtol=5e-2)

    print("KERNEL_OK")
</pallas_src>

<mosaic_0001>
module attributes {stable_mosaic.version = 11 : i64} {
  func.func @_link_pred_kernel(%arg0: i32, %arg1: memref<128x128xf32, #tpu.memory_space<vmem>>, %arg2: memref<128x128xf32, #tpu.memory_space<vmem>>, %arg3: memref<1x128xf32, #tpu.memory_space<vmem>>, %arg4: memref<1x128xf32, #tpu.memory_space<vmem>>, %arg5: memref<1xf32, #tpu.memory_space<smem>>, %arg6: memref<1x128xf32, #tpu.memory_space<vmem>>) attributes {dimension_semantics = [#tpu.dimension_semantics<parallel>], iteration_bounds = array<i64: 1>, scalar_prefetch = 0 : i64, scratch_operands = 0 : i64, tpu.core_type = #tpu.core_type<tc>, window_params = [{transform_indices = @transform_0, window_bounds = array<i64: 128, 128>}, {pipeline_mode = #tpu.pipeline_mode<synchronous>, transform_indices = @transform_1, window_bounds = array<i64: 128, 128>}, {pipeline_mode = #tpu.pipeline_mode<synchronous>, transform_indices = @transform_2, window_bounds = array<i64: 1, 128>}, {pipeline_mode = #tpu.pipeline_mode<synchronous>, transform_indices = @transform_3, window_bounds = array<i64: 1, 128>}, {transform_indices = @transform_4, window_bounds = array<i64: 1>}, {transform_indices = @transform_5, window_bounds = array<i64: 1, 128>}]} {
    %c0 = arith.constant 0 : index
    %c0_0 = arith.constant 0 : index
    %0 = vector.load %arg1[%c0, %c0_0] : memref<128x128xf32, #tpu.memory_space<vmem>>, vector<128x128xf32>
    %c0_1 = arith.constant 0 : index
    %c0_2 = arith.constant 0 : index
    %1 = vector.load %arg2[%c0_1, %c0_2] : memref<128x128xf32, #tpu.memory_space<vmem>>, vector<128x128xf32>
    %cst = arith.constant dense<0.000000e+00> : vector<128x128xf32>
    %2 = tpu.matmul %0, %1, %cst {dimension_numbers = #tpu.dot_dimension_numbers<[1], [0], [0], [1], [0, 0, 1, 1], [], []>} : vector<128x128xf32>, vector<128x128xf32>, vector<128x128xf32> -> vector<128x128xf32>
    %c0_3 = arith.constant 0 : index
    %c0_4 = arith.constant 0 : index
    %3 = vector.load %arg3[%c0_3, %c0_4] : memref<1x128xf32, #tpu.memory_space<vmem>>, vector<1x128xf32>
    %4 = vector.broadcast %3 : vector<1x128xf32> to vector<128x128xf32>
    %5 = arith.addf %2, %4 : vector<128x128xf32>
    %cst_5 = arith.constant 0.000000e+00 : f32
    %6 = vector.broadcast %cst_5 : f32 to vector<128x128xf32>
    %7 = arith.maximumf %5, %6 : vector<128x128xf32>
    %c0_6 = arith.constant 0 : index
    %c0_7 = arith.constant 0 : index
    %8 = vector.load %arg4[%c0_6, %c0_7] : memref<1x128xf32, #tpu.memory_space<vmem>>, vector<1x128xf32>
    "tpu.trace_start"() <{level = 10 : i32, message = "oc,nc->on"}> : () -> ()
    %cst_8 = arith.constant dense<0.000000e+00> : vector<1x128xf32>
    %9 = tpu.matmul %8, %7, %cst_8 {dimension_numbers = #tpu.dot_dimension_numbers<[1], [1], [0], [0], [0, 0, 1, 0], [], []>} : vector<1x128xf32>, vector<128x128xf32>, vector<1x128xf32> -> vector<1x128xf32>
    "tpu.trace_stop"() : () -> ()
    %c0_9 = arith.constant 0 : index
    %10 = memref.load %arg5[%c0_9] : memref<1xf32, #tpu.memory_space<smem>>
    %11 = vector.broadcast %10 : f32 to vector<1x128xf32>
    %12 = arith.addf %9, %11 : vector<1x128xf32>
    %c0_10 = arith.constant 0 : index
    %c0_11 = arith.constant 0 : index
    %13 = vector.load %arg6[%c0_10, %c0_11] : memref<1x128xf32, #tpu.memory_space<vmem>>, vector<1x128xf32>
    tpu.vector_store %arg6[%c0_10, %c0_11], %12 {strides = array<i32>} : memref<1x128xf32, #tpu.memory_space<vmem>>, vector<1x128xf32>,
    return
  }
  func.func @transform_0(%arg0: i32) -> (i32, i32) {
    %c0_i32 = arith.constant 0 : i32
    %c0_i32_0 = arith.constant 0 : i32
    return %arg0, %c0_i32 : i32, i32
  }
  func.func @transform_1(%arg0: i32) -> (i32, i32) {
    %c0_i32 = arith.constant 0 : i32
    %c0_i32_0 = arith.constant 0 : i32
    %c0_i32_1 = arith.constant 0 : i32
    return %c0_i32, %c0_i32_0 : i32, i32
  }
  func.func @transform_2(%arg0: i32) -> (i32, i32) {
    %c0_i32 = arith.constant 0 : i32
    %c0_i32_0 = arith.constant 0 : i32
    %c0_i32_1 = arith.constant 0 : i32
    return %c0_i32, %c0_i32_0 : i32, i32
  }
  func.func @transform_3(%arg0: i32) -> (i32, i32) {
    %c0_i32 = arith.constant 0 : i32
    %c0_i32_0 = arith.constant 0 : i32
    %c0_i32_1 = arith.constant 0 : i32
    return %c0_i32, %c0_i32_0 : i32, i32
  }
  func.func @transform_4(%arg0: i32) -> i32 {
    %c0_i32 = arith.constant 0 : i32
    %c0_i32_0 = arith.constant 0 : i32
    return %c0_i32 : i32
  }
  func.func @transform_5(%arg0: i32) -> (i32, i32) {
    %c0_i32 = arith.constant 0 : i32
    %c0_i32_0 = arith.constant 0 : i32
    return %c0_i32, %arg0 : i32, i32
  }
}

</mosaic_0001>

<llo_original>
// kernel: tpu_custom_call.1
$region0: #{tpu_custom_call.1}
  #allocation0 [shape = 'u32[]', space=smem, size = 0x4, offset = 0x4, fixed_abs, tag = 'smem constant byte address 0x4 - core index']
  #allocation1 [shape = 'u32[144,128]{1,0:T(1,128)}', space=vmem, size = 0x12000, scoped, tag = 'internal scratch']
  #allocation2 [shape = 'f32[1]{0:T(128)S(6)}', space=smem, size = 0x200, scoped, tag = 'scoped memory for tpu_custom_call.1']
  %s0 = inlined_call_operand.hbm [shape: f32[128,128], index: 0, kind: input, shape index: {}]
  %s1 = inlined_call_operand.hbm [shape: f32[128,128], index: 1, kind: input, shape index: {}]
  %s2 = inlined_call_operand.vmem [shape: f32[1,128], index: 2, kind: input, shape index: {}]
  %s3 = inlined_call_operand.vmem [shape: f32[1,128], index: 3, kind: input, shape index: {}]
  %s4 = inlined_call_operand.<no memory space> [shape: f32[1], index: 4, kind: input, shape index: {}]
  %s5 = inlined_call_operand.hbm [shape: f32[1,128], index: 5, kind: output, shape index: {}]
  %s6 = sld [smem:[#allocation0]]
  $region38: #{tpu_custom_call.1} parent=0
    _
  %s8 = ssub.s32 1, %s6
  %s9 = scalar_select 0, %s8, %s6
  %10 = sst [smem:[#allocation2]] %s4
  $region1: #{tpu_custom_call.1} parent=0
    #allocation3 [shape = 'u8[65536]{0}', space=vmem, size = 0x10000, scoped, tag = 'input window, operand 0, single buffered']
    #allocation4 [shape = 's32[1]{0}', space=sflag, size = 0x4, scoped, tag = 'scoped memory for tpu_custom_call.1']
    #allocation5 [shape = 's32[1]{0}', space=sflag, size = 0x4, scoped, tag = 'scoped memory for tpu_custom_call.1']
    #allocation6 [shape = 'u8[65536]{0}', space=vmem, size = 0x10000, scoped, tag = 'input window, operand 1, single buffered']
    #allocation7 [shape = 's32[1]{0}', space=sflag, size = 0x4, scoped, tag = 'scoped memory for tpu_custom_call.1']
    #allocation8 [shape = 'u8[512]{0}', space=vmem, size = 0x400, scoped, tag = 'output window, operand 0, single buffered']
    %11 = vsyncpa [#allocation4], 0
    %12 = vsyncpa [#allocation7], 0
    %13 = vsyncpa [#allocation5], 0
    // Predicated region
    $region2: #{tpu_custom_call.1} parent=1 // pred_check
      _
    $region3: #{tpu_custom_call.1} parent=1 // pred_check_branch
      %15 = sbr.rel (0) target = $region5
    $region4: #{tpu_custom_call.1} parent=1 // pred_region
      %s17 = ssub.s32 2048, 2048
      %18 = vsyncadd [#allocation4], %s17
      %s19 = sshll.u32 [#allocation3], 4
      %s20 = int_to_ptr.vmem [resolvable:$true] %s19
      %25 = dma.hbm_to_vmem [thread:$0]  %s0, 2048, %s20, [#allocation4], 128, 128, 8
    $region5: #{tpu_custom_call.1} parent=1 // pred_fallthru
      _
    // Predicated region
    $region6: #{tpu_custom_call.1} parent=1 // pred_check
      _
    $region7: #{tpu_custom_call.1} parent=1 // pred_check_branch
      %27 = sbr.rel (0) target = $region9
    $region8: #{tpu_custom_call.1} parent=1 // pred_region
      %s29 = ssub.s32 2048, 2048
      %30 = vsyncadd [#allocation7], %s29
      %s31 = sshll.u32 [#allocation6], 4
      %s32 = int_to_ptr.vmem [resolvable:$true] %s31
      %37 = dma.hbm_to_vmem [thread:$0]  %s1, 2048, %s32, [#allocation7], 128, 128, 8
    $region9: #{tpu_custom_call.1} parent=1 // pred_fallthru
      _
    // Predicated region
    $region10: #{tpu_custom_call.1} parent=1 // pred_check
      _
    $region11: #{tpu_custom_call.1} parent=1 // pred_check_branch
      %39 = sbr.rel (0) target = $region13
    $region12: #{tpu_custom_call.1} parent=1 // pred_region
      _
    $region13: #{tpu_custom_call.1} parent=1 // pred_fallthru
      _
    // Predicated region
    $region14: #{tpu_custom_call.1} parent=1 // pred_check
      _
    $region15: #{tpu_custom_call.1} parent=1 // pred_check_branch
      %41 = sbr.rel (0) target = $region17
    $region16: #{tpu_custom_call.1} parent=1 // pred_region
      _
    $region17: #{tpu_custom_call.1} parent=1 // pred_fallthru
      _
    // Predicated region
    $region18: #{tpu_custom_call.1} parent=1 // pred_check
      _
    $region19: #{tpu_custom_call.1} parent=1 // pred_check_branch
      %43 = sbr.rel (0) target = $region21
    $region20: #{tpu_custom_call.1} parent=1 // pred_region
      _
    $region21: #{tpu_custom_call.1} parent=1 // pred_fallthru
      _
    // Predicated region
    $region22: #{tpu_custom_call.1} parent=1 // pred_check
      _
    $region23: #{tpu_custom_call.1} parent=1 // pred_check_branch
      %45 = sbr.rel (0) target = $region25
    $region24: #{tpu_custom_call.1} parent=1 // pred_region
      %46 = dma.done [#allocation4], 2048
    $region25: #{tpu_custom_call.1} parent=1 // pred_fallthru
      _
    // Predicated region
    $region26: #{tpu_custom_call.1} parent=1 // pred_check
      _
    $region27: #{tpu_custom_call.1} parent=1 // pred_check_branch
      %48 = sbr.rel (0) target = $region29
    $region28: #{tpu_custom_call.1} parent=1 // pred_region
      %49 = dma.done [#allocation7], 2048
    $region29: #{tpu_custom_call.1} parent=1 // pred_fallthru
      _
    %v50 = vld [vmem:[#allocation3] sm:$0xff]
    %v51 = vld [vmem:[#allocation3 + $0x8] sm:$0xff]
    %v52 = vld [vmem:[#allocation3 + $0x10] sm:$0xff]
    %v53 = vld [vmem:[#allocation3 + $0x18] sm:$0xff]
    %v54 = vld [vmem:[#allocation3 + $0x20] sm:$0xff]
    %v55 = vld [vmem:[#allocation3 + $0x28] sm:$0xff]
    %v56 = vld [vmem:[#allocation3 + $0x30] sm:$0xff]
    %v57 = vld [vmem:[#allocation3 + $0x38] sm:$0xff]
    %v58 = vld [vmem:[#allocation3 + $0x40] sm:$0xff]
    %v59 = vld [vmem:[#allocation3 + $0x48] sm:$0xff]
    %v60 = vld [vmem:[#allocation3 + $0x50] sm:$0xff]
    %v61 = vld [vmem:[#allocation3 + $0x58] sm:$0xff]
    %v62 = vld [vmem:[#allocation3 + $0x60] sm:$0xff]
    %v63 = vld [vmem:[#allocation3 + $0x68] sm:$0xff]
    %v64 = vld [vmem:[#allocation3 + $0x70] sm:$0xff]
    %v65 = vld [vmem:[#allocation3 + $0x78] sm:$0xff]
    %v66 = vld [vmem:[#allocation6] sm:$0xff]
    %v67 = vld [vmem:[#allocation6 + $0x8] sm:$0xff]
    %v68 = vld [vmem:[#allocation6 + $0x10] sm:$0xff]
    %v69 = vld [vmem:[#allocation6 + $0x18] sm:$0xff]
    %v70 = vld [vmem:[#allocation6 + $0x20] sm:$0xff]
    %v71 = vld [vmem:[#allocation6 + $0x28] sm:$0xff]
    %v72 = vld [vmem:[#allocation6 + $0x30] sm:$0xff]
    %v73 = vld [vmem:[#allocation6 + $0x38] sm:$0xff]
    %v74 = vld [vmem:[#allocation6 + $0x40] sm:$0xff]
    %v75 = vld [vmem:[#allocation6 + $0x48] sm:$0xff]
    %v76 = vld [vmem:[#allocation6 + $0x50] sm:$0xff]
    %v77 = vld [vmem:[#allocation6 + $0x58] sm:$0xff]
    %v78 = vld [vmem:[#allocation6 + $0x60] sm:$0xff]
    %v79 = vld [vmem:[#allocation6 + $0x68] sm:$0xff]
    %v80 = vld [vmem:[#allocation6 + $0x70] sm:$0xff]
    %v81 = vld [vmem:[#allocation6 + $0x78] sm:$0xff]
    %v82 = vld [vmem:[%s2] sm:$0x1]
    %v84 = vlaneseq
    %v85 = vshrl.u32 %v84, 7
    %v86 = vsub.s32 0, %v85
    %v87 = vrot.slane %v82, %v86
    %89 = vmatprep.subr.mxu0 0.0
    %90 = vmatpush1.msra.mxu0 %v81
    %91 = vmatprep.subr.mxu0 0.0
    %92 = vmatpush1.msra.mxu0 %v80
    %93 = vmatprep.subr.mxu0 0.0
    %94 = vmatpush1.msra.mxu0 %v79
    %95 = vmatprep.subr.mxu0 0.0
    %96 = vmatpush1.msra.mxu0 %v78
    %97 = vmatprep.subr.mxu0 0.0
    %98 = vmatpush1.msra.mxu0 %v77
    %99 = vmatprep.subr.mxu0 0.0
    %100 = vmatpush1.msra.mxu0 %v76
    %101 = vmatprep.subr.mxu0 0.0
    %102 = vmatpush1.msra.mxu0 %v75
    %103 = vmatprep.subr.mxu0 0.0
    %104 = vmatpush1.msra.mxu0 %v74
    %105 = vmatprep.subr.mxu0 0.0
    %106 = vmatpush1.msra.mxu0 %v73
    %107 = vmatprep.subr.mxu0 0.0
    %108 = vmatpush1.msra.mxu0 %v72
    %109 = vmatprep.subr.mxu0 0.0
    %110 = vmatpush1.msra.mxu0 %v71
    %111 = vmatprep.subr.mxu0 0.0
    %112 = vmatpush1.msra.mxu0 %v70
    %113 = vmatprep.subr.mxu0 0.0
    %114 = vmatpush1.msra.mxu0 %v69
    %115 = vmatprep.subr.mxu0 0.0
    %116 = vmatpush1.msra.mxu0 %v68
    %117 = vmatprep.subr.mxu0 0.0
    %118 = vmatpush1.msra.mxu0 %v67
    %119 = vmatprep.subr.mxu0 0.0
    %120 = vmatpush1.msra.mxu0 %v66
    %121 = vmatprep.subr.mxu0 0.0
    %122 = vmatpush2.msra.mxu0 0.0
    %123 = vmatprep.subr.mxu0 0.0
    %124 = vmatpush2.msra.mxu0 0.0
    %125 = vmatprep.subr.mxu0 0.0
    %126 = vmatpush2.msra.mxu0 0.0
    %127 = vmatprep.subr.mxu0 0.0
    %128 = vmatpush2.msra.mxu0 0.0
    %129 = vmatprep.subr.mxu0 0.0
    %130 = vmatpush2.msra.mxu0 0.0
    %131 = vmatprep.subr.mxu0 0.0
    %132 = vmatpush2.msra.mxu0 0.0
    %133 = vmatprep.subr.mxu0 0.0
    %134 = vmatpush2.msra.mxu0 0.0
    %135 = vmatprep.subr.mxu0 0.0
    %136 = vmatpush2.msra.mxu0 0.0
    %137 = vmatprep.subr.mxu0 0.0
    %138 = vmatpush2.msra.mxu0 0.0
    %139 = vmatprep.subr.mxu0 0.0
    %140 = vmatpush2.msra.mxu0 0.0
    %141 = vmatprep.subr.mxu0 0.0
    %142 = vmatpush2.msra.mxu0 0.0
    %143 = vmatprep.subr.mxu0 0.0
    %144 = vmatpush2.msra.mxu0 0.0
    %145 = vmatprep.subr.mxu0 0.0
    %146 = vmatpush2.msra.mxu0 0.0
    %147 = vmatprep.subr.mxu0 0.0
    %148 = vmatpush2.msra.mxu0 0.0
    %149 = vmatprep.subr.mxu0 0.0
    %150 = vmatpush2.msra.mxu0 0.0
    %151 = vmatprep.subr.mxu0 0.0
    %152 = vmatpush2.msra.mxu0 0.0
    %153 = vmatprep.mubr.f32.mxu0 0.0
    %154 = vmatmul.mubr.f32.gmra.mxu0 %v50
    %v155 = vpop.f32.mrf.mxu0
    %v156 = vadd.f32 %v87, %v155
    %v157 = vpop.f32.mrf.mxu0
    %158 = vmatprep.mubr.f32.mxu0 0.0
    %159 = vmatmul.mubr.f32.gmra.mxu0 %v51
    %v160 = vpop.f32.mrf.mxu0
    %v161 = vadd.f32 %v87, %v160
    %v162 = vpop.f32.mrf.mxu0
    %163 = vmatprep.mubr.f32.mxu0 0.0
    %164 = vmatmul.mubr.f32.gmra.mxu0 %v52
    %v165 = vpop.f32.mrf.mxu0
    %v166 = vadd.f32 %v87, %v165
    %v167 = vpop.f32.mrf.mxu0
    %168 = vmatprep.mubr.f32.mxu0 0.0
    %169 = vmatmul.mubr.f32.gmra.mxu0 %v53
    %v170 = vpop.f32.mrf.mxu0
    %v171 = vadd.f32 %v87, %v170
    %v172 = vpop.f32.mrf.mxu0
    %173 = vmatprep.mubr.f32.mxu0 0.0
    %174 = vmatmul.mubr.f32.gmra.mxu0 %v54
    %v175 = vpop.f32.mrf.mxu0
    %v176 = vadd.f32 %v87, %v175
    %v177 = vpop.f32.mrf.mxu0
    %178 = vmatprep.mubr.f32.mxu0 0.0
    %179 = vmatmul.mubr.f32.gmra.mxu0 %v55
    %v180 = vpop.f32.mrf.mxu0
    %v181 = vadd.f32 %v87, %v180
    %v182 = vpop.f32.mrf.mxu0
    %183 = vmatprep.mubr.f32.mxu0 0.0
    %184 = vmatmul.mubr.f32.gmra.mxu0 %v56
    %v185 = vpop.f32.mrf.mxu0
    %v186 = vadd.f32 %v87, %v185
    %v187 = vpop.f32.mrf.mxu0
    %188 = vmatprep.mubr.f32.mxu0 0.0
    %189 = vmatmul.mubr.f32.gmra.mxu0 %v57
    %v190 = vpop.f32.mrf.mxu0
    %v191 = vadd.f32 %v87, %v190
    %v192 = vpop.f32.mrf.mxu0
    %193 = vmatprep.mubr.f32.mxu0 0.0
    %194 = vmatmul.mubr.f32.gmra.mxu0 %v58
    %v195 = vpop.f32.mrf.mxu0
    %v196 = vadd.f32 %v87, %v195
    %v197 = vpop.f32.mrf.mxu0
    %198 = vmatprep.mubr.f32.mxu0 0.0
    %199 = vmatmul.mubr.f32.gmra.mxu0 %v59
    %v200 = vpop.f32.mrf.mxu0
    %v201 = vadd.f32 %v87, %v200
    %v202 = vpop.f32.mrf.mxu0
    %203 = vmatprep.mubr.f32.mxu0 0.0
    %204 = vmatmul.mubr.f32.gmra.mxu0 %v60
    %v205 = vpop.f32.mrf.mxu0
    %v206 = vadd.f32 %v87, %v205
    %v207 = vpop.f32.mrf.mxu0
    %208 = vmatprep.mubr.f32.mxu0 0.0
    %209 = vmatmul.mubr.f32.gmra.mxu0 %v61
    %v210 = vpop.f32.mrf.mxu0
    %v211 = vadd.f32 %v87, %v210
    %v212 = vpop.f32.mrf.mxu0
    %213 = vmatprep.mubr.f32.mxu0 0.0
    %214 = vmatmul.mubr.f32.gmra.mxu0 %v62
    %v215 = vpop.f32.mrf.mxu0
    %v216 = vadd.f32 %v87, %v215
    %v217 = vpop.f32.mrf.mxu0
    %218 = vmatprep.mubr.f32.mxu0 0.0
    %219 = vmatmul.mubr.f32.gmra.mxu0 %v63
    %v220 = vpop.f32.mrf.mxu0
    %v221 = vadd.f32 %v87, %v220
    %v222 = vpop.f32.mrf.mxu0
    %223 = vmatprep.mubr.f32.mxu0 0.0
    %224 = vmatmul.mubr.f32.gmra.mxu0 %v64
    %v225 = vpop.f32.mrf.mxu0
    %v226 = vadd.f32 %v87, %v225
    %v227 = vpop.f32.mrf.mxu0
    %228 = vmatprep.mubr.f32.mxu0 0.0
    %229 = vmatmul.mubr.f32.gmra.mxu0 %v65
    %v230 = vpop.f32.mrf.mxu0
    %v231 = vadd.f32 %v87, %v230
    %v232 = vpop.f32.mrf.mxu0
    %233 = vdwg.mxu0
    %v234 = vmax.f32 %v156, 0.0
    %v235 = vmax.f32 %v161, 0.0
    %v236 = vmax.f32 %v166, 0.0
    %v237 = vmax.f32 %v171, 0.0
    %v238 = vmax.f32 %v176, 0.0
    %v239 = vmax.f32 %v181, 0.0
    %v240 = vmax.f32 %v186, 0.0
    %v241 = vmax.f32 %v191, 0.0
    %v242 = vmax.f32 %v196, 0.0
    %v243 = vmax.f32 %v201, 0.0
    %v244 = vmax.f32 %v206, 0.0
    %v245 = vmax.f32 %v211, 0.0
    %v246 = vmax.f32 %v216, 0.0
    %v247 = vmax.f32 %v221, 0.0
    %v248 = vmax.f32 %v226, 0.0
    %v249 = vmax.f32 %v231, 0.0
    %v250 = vld [vmem:[%s3] sm:$0x1]
    %s251 = sld [smem:[#allocation2]]
    %v252 = vstv %s251
    %253 = vmatprep.subr.mxu0 0.0
    %254 = vmatpush1.xpose.msra.mxu0 %v249
    %255 = vmatprep.subr.mxu0 0.0
    %256 = vmatpush1.xpose.msra.mxu0 %v248
    %257 = vmatprep.subr.mxu0 0.0
    %258 = vmatpush1.xpose.msra.mxu0 %v247
    %259 = vmatprep.subr.mxu0 0.0
    %260 = vmatpush1.xpose.msra.mxu0 %v246
    %261 = vmatprep.subr.mxu0 0.0
    %262 = vmatpush1.xpose.msra.mxu0 %v245
    %263 = vmatprep.subr.mxu0 0.0
    %264 = vmatpush1.xpose.msra.mxu0 %v244
    %265 = vmatprep.subr.mxu0 0.0
    %266 = vmatpush1.xpose.msra.mxu0 %v243
    %267 = vmatprep.subr.mxu0 0.0
    %268 = vmatpush1.xpose.msra.mxu0 %v242
    %269 = vmatprep.subr.mxu0 0.0
    %270 = vmatpush1.xpose.msra.mxu0 %v241
    %271 = vmatprep.subr.mxu0 0.0
    %272 = vmatpush1.xpose.msra.mxu0 %v240
    %273 = vmatprep.subr.mxu0 0.0
    %274 = vmatpush1.xpose.msra.mxu0 %v239
    %275 = vmatprep.subr.mxu0 0.0
    %276 = vmatpush1.xpose.msra.mxu0 %v238
    %277 = vmatprep.subr.mxu0 0.0
    %278 = vmatpush1.xpose.msra.mxu0 %v237
    %279 = vmatprep.subr.mxu0 0.0
    %280 = vmatpush1.xpose.msra.mxu0 %v236
    %281 = vmatprep.subr.mxu0 0.0
    %282 = vmatpush1.xpose.msra.mxu0 %v235
    %283 = vmatprep.subr.mxu0 0.0
    %284 = vmatpush1.xpose.msra.mxu0 %v234
    %285 = vmatprep.subr.mxu0 0.0
    %286 = vmatpush2.xpose.msra.mxu0 0.0
    %287 = vmatprep.subr.mxu0 0.0
    %288 = vmatpush2.xpose.msra.mxu0 0.0
    %289 = vmatprep.subr.mxu0 0.0
    %290 = vmatpush2.xpose.msra.mxu0 0.0
    %291 = vmatprep.subr.mxu0 0.0
    %292 = vmatpush2.xpose.msra.mxu0 0.0
    %293 = vmatprep.subr.mxu0 0.0
    %294 = vmatpush2.xpose.msra.mxu0 0.0
    %295 = vmatprep.subr.mxu0 0.0
    %296 = vmatpush2.xpose.msra.mxu0 0.0
    %297 = vmatprep.subr.mxu0 0.0
    %298 = vmatpush2.xpose.msra.mxu0 0.0
    %299 = vmatprep.subr.mxu0 0.0
    %300 = vmatpush2.xpose.msra.mxu0 0.0
    %301 = vmatprep.subr.mxu0 0.0
    %302 = vmatpush2.xpose.msra.mxu0 0.0
    %303 = vmatprep.subr.mxu0 0.0
    %304 = vmatpush2.xpose.msra.mxu0 0.0
    %305 = vmatprep.subr.mxu0 0.0
    %306 = vmatpush2.xpose.msra.mxu0 0.0
    %307 = vmatprep.subr.mxu0 0.0
    %308 = vmatpush2.xpose.msra.mxu0 0.0
    %309 = vmatprep.subr.mxu0 0.0
    %310 = vmatpush2.xpose.msra.mxu0 0.0
    %311 = vmatprep.subr.mxu0 0.0
    %312 = vmatpush2.xpose.msra.mxu0 0.0
    %313 = vmatprep.subr.mxu0 0.0
    %314 = vmatpush2.xpose.msra.mxu0 0.0
    %315 = vmatprep.subr.mxu0 0.0
    %316 = vmatpush2.xpose.msra.mxu0 0.0
    %317 = vmatprep.mubr.f32.mxu0 0.0
    %318 = vmatmul.mubr.f32.gmra.mxu0 %v250
    %v319 = vpop.f32.mrf.mxu0
    %v320 = vadd.f32 %v252, %v319
    %v321 = vpop.f32.mrf.mxu0
    %322 = vdwg.mxu0
    %323 = vst [vmem:[#allocation8] sm:$0x1] %v320
    // Predicated region
    $region30: #{tpu_custom_call.1} parent=1 // pred_check
      _
    $region31: #{tpu_custom_call.1} parent=1 // pred_check_branch
      %325 = sbr.rel (0) target = $region33
    $region32: #{tpu_custom_call.1} parent=1 // pred_region
      %s327 = ssub.s32 16, 16
      %328 = vsyncadd [#allocation5], %s327
      %s330 = sshll.u32 [#allocation8], 4
      %s331 = int_to_ptr.vmem [resolvable:$true] %s330
      %333 = dma.vmem_to_hbm [thread:$0]  %s331, 16, %s5, [#allocation5]
    $region33: #{tpu_custom_call.1} parent=1 // pred_fallthru
      _
    // Predicated region
    $region34: #{tpu_custom_call.1} parent=1 // pred_check
      _
    $region35: #{tpu_custom_call.1} parent=1 // pred_check_branch
      %335 = sbr.rel (0) target = $region37
    $region36: #{tpu_custom_call.1} parent=1 // pred_region
      %336 = dma.done [#allocation5], 16
    $region37: #{tpu_custom_call.1} parent=1 // pred_fallthru
      _
    %337 = vsyncpa [#allocation4], 1
    %338 = vsyncpa [#allocation7], 1
    %339 = vsyncpa [#allocation5], 1

</llo_original>
